<compile_context>
chip_gen: v7x
topology: tpu7x:2x2x1
jax: 0.10.0
libtpu: 0.0.40
codegen_flags: <defaults>
</compile_context>

<pallas_src>
import functools

import jax
import jax.numpy as jnp
from jax import lax
from jax.experimental import pallas as pl
from jax.experimental.pallas import tpu as pltpu

EPSILON = 0.1        # cfg.MODEL.EMBEDDING.EPSILON (label smoothing)
TEMPERATURE = 0.07   # self.T
ALPHA, BETA = 0.6, 0.4
SCALE_POS, SCALE_NEG = 10.0, 40.0
_NEG_BIG = -1e30     # mask value for padded class columns


def _round_up(x, m):
    return (x + m - 1) // m * m


# ------------------------- fused kernel -------------------------

def _fused_loss_kernel(vt_ref, proj_ref, lab_ref, pos_ref, neg_ref,   # inputs
                       out_ref,                                       # output (2B, 128)
                       m_sc, s_sc, sum_sc, plog_sc,                   # scratch
                       *, num_classes, inv_T,
                       alpha, beta, scale_pos, scale_neg):
    split = pl.program_id(0)          # class-range split (parallel across TCs)
    k = pl.program_id(1)              # class tile within the split
    nk = pl.num_programs(1)
    tile_c = proj_ref.shape[1]
    two_b = vt_ref.shape[0]
    b = two_b // 2

    # -------- per-split init (and output zero-init insurance) --------
    @pl.when(k == 0)
    def _():
        m_sc[...] = jnp.full(m_sc.shape, _NEG_BIG, jnp.float32)
        s_sc[...] = jnp.zeros(s_sc.shape, jnp.float32)
        sum_sc[...] = jnp.zeros(sum_sc.shape, jnp.float32)
        plog_sc[...] = jnp.zeros(plog_sc.shape, jnp.float32)
        out_ref[...] = jnp.zeros(out_ref.shape, jnp.float32)

    # -------- InfoNCE + global-align: residents only, computed at step (0,0)
    # so their EUP/MXU/XLU work hides under the DMA of projection tile 1. ----
    @pl.when(jnp.logical_and(split == 0, k == 0))
    def _():
        # InfoNCE: CE against class 0 of [pos | neg] * (1/T), v & t stacked.
        p = pos_ref[...] * inv_T                                       # (2B, 1)
        n = neg_ref[...] * inv_T                                       # (2B, K)
        mm = jnp.maximum(p, jnp.max(n, axis=1, keepdims=True))
        lse_nce = mm + jnp.log(jnp.exp(p - mm)
                               + jnp.sum(jnp.exp(n - mm), axis=1, keepdims=True))
        infonce = jnp.sum(lse_nce - p) / b

        # global alignment: masked stable softplus over the BxB similarity.
        vt = vt_ref[...]
        v = vt[:b, :]
        t = vt[b:, :]
        vn = v * lax.rsqrt(jnp.maximum(jnp.sum(v * v, axis=1, keepdims=True), 1e-24))
        tn = t * lax.rsqrt(jnp.maximum(jnp.sum(t * t, axis=1, keepdims=True), 1e-24))
        sim = lax.dot_general(vn, tn, (((1,), (1,)), ((), ())),
                              preferred_element_type=jnp.float32)      # (B, B)
        lab = lab_ref[...][:b, :]
        match = lab == jnp.transpose(lab)                              # (B, B)
        arg = jnp.where(match,
                        -scale_pos * (sim - alpha),
                        scale_neg * (sim - beta))
        softplus = jnp.maximum(arg, 0.0) + jnp.log1p(jnp.exp(-jnp.abs(arg)))
        global_align = jnp.sum(softplus) * 2.0 / b

        lane0 = lax.broadcasted_iota(jnp.int32, out_ref.shape, 1)
        out_ref[...] = jnp.where(lane0 == 4, infonce,
                                 jnp.where(lane0 == 5, global_align, 0.0))

    # -------- instance loss: one MXU pass per class tile, stacked [v; t] ----
    tile_global = split * nk + k
    vt = vt_ref[...]                                                   # (2B, D) f32
    # bf16 projection tile (column-pre-normalized in the wrapper); accumulate f32.
    logits = jnp.dot(vt, proj_ref[...].astype(jnp.float32),
                     preferred_element_type=jnp.float32)               # (2B, TC)

    lane = lax.broadcasted_iota(jnp.int32, (two_b, tile_c), 1)

    # Padded columns are exact zeros -> contribute 0 to the plain sum (no mask).
    sum_sc[...] += jnp.sum(logits, axis=1, keepdims=True)
    lab_local = lab_ref[...] - tile_global * tile_c                    # (2B, 1)
    plog_sc[...] += jnp.sum(jnp.where(lane == lab_local, logits, 0.0),
                            axis=1, keepdims=True)

    # Online logsumexp; padded-column mask only on tiles that contain padding.
    def _lse_update(lg):
        m_old = m_sc[...]
        m_new = jnp.maximum(m_old, jnp.max(lg, axis=1, keepdims=True))
        s_sc[...] = (s_sc[...] * jnp.exp(m_old - m_new)
                     + jnp.sum(jnp.exp(lg - m_new), axis=1, keepdims=True))
        m_sc[...] = m_new

    has_pad = tile_global * tile_c + tile_c > num_classes

    @pl.when(jnp.logical_not(has_pad))
    def _():
        _lse_update(logits)

    @pl.when(has_pad)
    def _():
        valid = lane < (num_classes - tile_global * tile_c)
        _lse_update(jnp.where(valid, logits, _NEG_BIG))

    # -------- per-split stats writeback (smoothed-CE combine in the wrapper) --
    @pl.when(k == nk - 1)
    def _():
        lane1 = lax.broadcasted_iota(jnp.int32, out_ref.shape, 1)
        out_ref[...] = jnp.where(lane1 == 0, m_sc[...],
                                 jnp.where(lane1 == 1, s_sc[...],
                                           jnp.where(lane1 == 2, sum_sc[...],
                                                     jnp.where(lane1 == 3, plog_sc[...],
                                                               out_ref[...]))))


# ------------------------- wrapper -------------------------

def loss_computation(projection, v_embed, t_embed, v_pos, v_neg, t_pos, t_neg,
                     labels, *, max_tile_c=4096):
    D, C = projection.shape
    B = v_embed.shape[0]
    K = v_neg.shape[1]
    two_b = 2 * B

    # lane-dense class padding + tile size (bounds VMEM for large C)
    c_pad = _round_up(C, 128)
    tile_c = min(c_pad, _round_up(max_tile_c, 128))
    total_tiles = (c_pad + tile_c - 1) // tile_c
    # 2-way class split across TensorCores (v7x) when there is enough work and
    # the per-split output block stays (8, 128)-aligned.
    num_splits = 2 if (total_tiles >= 2 and two_b % 8 == 0) else 1
    nk = (total_tiles + num_splits - 1) // num_splits        # class tiles per split
    c_pad = num_splits * nk * tile_c

    # Column-normalize in f32, cast bf16, pad -- one fused XLA pass.
    pf32 = projection.astype(jnp.float32)
    inv_norm = 1.0 / jnp.maximum(
        jnp.sqrt(jnp.sum(pf32 * pf32, axis=0, keepdims=True)), 1e-12)
    proj_p = jnp.pad((pf32 * inv_norm).astype(jnp.bfloat16),
                     ((0, 0), (0, c_pad - C)))
    # TODO(synk): in a training loop, keep the projection stored pre-normalized /
    # bf16 / padded outside the hot path so this prep pass disappears per step.

    vt = jnp.concatenate([v_embed, t_embed], axis=0).astype(jnp.float32)    # (2B, D)
    vt_pos = jnp.concatenate([v_pos, t_pos], axis=0).astype(jnp.float32)    # (2B, 1)
    vt_neg = jnp.concatenate([v_neg, t_neg], axis=0).astype(jnp.float32)    # (2B, K)
    lab2 = jnp.concatenate([labels, labels], axis=0).astype(jnp.int32)
    lab2 = lab2.reshape(two_b, 1)

    kernel = functools.partial(
        _fused_loss_kernel,
        num_classes=C, inv_T=1.0 / TEMPERATURE,
        alpha=ALPHA, beta=BETA, scale_pos=SCALE_POS, scale_neg=SCALE_NEG)

    # VMEM budget: double-buffered bf16 proj tile + f32 residents + out + scratch.
    vmem_est = (2 * D * tile_c * 2
                + 2 * two_b * (D + K + 2) * 4
                + 2 * two_b * 128 * 4
                + 4 * max(two_b, 8) * 128 * 4)
    vmem_limit = int(min(vmem_est + (16 << 20), 64 << 20))

    out = pl.pallas_call(
        kernel,
        out_shape=jax.ShapeDtypeStruct((num_splits * two_b, 128), jnp.float32),
        grid_spec=pltpu.PrefetchScalarGridSpec(
            num_scalar_prefetch=0,
            grid=(num_splits, nk),
            in_specs=[
                pl.BlockSpec((two_b, D), lambda s, k: (0, 0)),       # stacked embeddings (resident)
                pl.BlockSpec((D, tile_c), lambda s, k: (0, s * nk + k)),  # bf16 projection tile
                pl.BlockSpec((two_b, 1), lambda s, k: (0, 0)),       # stacked labels (resident)
                pl.BlockSpec((two_b, 1), lambda s, k: (0, 0)),       # [v_pos; t_pos]
                pl.BlockSpec((two_b, K), lambda s, k: (0, 0)),       # [v_neg; t_neg]
                # TODO(synk): for very large MoCo queues K, single-buffer these
                # constant residents (pipeline_mode) or tile the neg matrix too.
            ],
            out_specs=pl.BlockSpec((two_b, 128), lambda s, k: (s, 0)),
            scratch_shapes=[pltpu.VMEM((two_b, 1), jnp.float32)] * 4,
        ),
        compiler_params=pltpu.CompilerParams(
            dimension_semantics=("parallel", "arbitrary"),
            vmem_limit_bytes=vmem_limit),
    )(vt, proj_p, lab2, vt_pos, vt_neg)

    # Tiny per-split stats combine (exact logsumexp merge) + smoothed CE.
    stats = out.reshape(num_splits, two_b, 128)
    m = stats[..., 0]                      # (S, 2B)
    s = stats[..., 1]
    sum_log = stats[..., 2]
    lab_log = stats[..., 3]
    m_tot = jnp.max(m, axis=0)                                   # (2B,)
    s_tot = jnp.sum(s * jnp.exp(m - m_tot[None, :]), axis=0)
    lse = m_tot + jnp.log(s_tot)
    instance = jnp.sum(lse
                       - (1.0 - EPSILON) * jnp.sum(lab_log, axis=0)
                       - (EPSILON / C) * jnp.sum(sum_log, axis=0)) / B

    return {"instance_loss": instance,
            "infonce_loss": stats[0, 0, 4],
            "global_align_loss": stats[0, 0, 5]}


# ------------------------- pure-JAX reference (for a sanity check) -------------------------

def _reference_losses(projection, v_embed, t_embed, v_pos, v_neg, t_pos, t_neg, labels):
    C = projection.shape[1]
    B = labels.shape[0]
    pn = projection / jnp.maximum(
        jnp.sqrt(jnp.sum(projection * projection, axis=0, keepdims=True)), 1e-12)

    def smooth_ce(logits):
        logp = jax.nn.log_softmax(logits, axis=1)
        onehot = jax.nn.one_hot(labels, C, dtype=jnp.float32)
        tg = (1.0 - EPSILON) * onehot + EPSILON / C
        return jnp.sum(-tg * logp) / B

    instance = smooth_ce(v_embed @ pn) + smooth_ce(t_embed @ pn)

    def ce0(pos, neg):
        logits = jnp.concatenate([pos, neg], axis=1) / TEMPERATURE
        return jnp.mean(jax.nn.logsumexp(logits, axis=1) - logits[:, 0])

    infonce = ce0(v_pos, v_neg) + ce0(t_pos, t_neg)

    vn = v_embed / jnp.maximum(
        jnp.sqrt(jnp.sum(v_embed * v_embed, axis=1, keepdims=True)), 1e-12)
    tn = t_embed / jnp.maximum(
        jnp.sqrt(jnp.sum(t_embed * t_embed, axis=1, keepdims=True)), 1e-12)
    sim = vn @ tn.T
    match = labels[:, None] == labels[None, :]
    pos_terms = jnp.log1p(jnp.exp(-SCALE_POS * (sim - ALPHA)))
    neg_terms = jnp.log1p(jnp.exp(SCALE_NEG * (sim - BETA)))
    global_align = (jnp.sum(jnp.where(match, pos_terms, 0.0))
                    + jnp.sum(jnp.where(match, 0.0, neg_terms))) * 2.0 / B
    return {"instance_loss": instance, "infonce_loss": infonce,
            "global_align_loss": global_align}


# ------------------------- demo -------------------------

if __name__ == "__main__":
    def _make_inputs(key, B, D, C, K):
        kp, kv, kt, kvp, kvn, ktp, ktn, kl = jax.random.split(key, 8)
        bound = (6.0 / (D + C)) ** 0.5   # xavier_uniform_(projection, gain=1)
        projection = jax.random.uniform(kp, (D, C), jnp.float32, -bound, bound)
        v_embed = jax.random.normal(kv, (B, D), jnp.float32)
        t_embed = jax.random.normal(kt, (B, D), jnp.float32)
        v_pos = jax.random.normal(kvp, (B, 1), jnp.float32)
        v_neg = jax.random.normal(kvn, (B, K), jnp.float32)
        t_pos = jax.random.normal(ktp, (B, 1), jnp.float32)
        t_neg = jax.random.normal(ktn, (B, K), jnp.float32)
        # duplicate identities so the match matrix has off-diagonal positives
        labels = jax.random.randint(kl, (B,), 0, max(C // 2, 1), jnp.int32)
        return (projection, v_embed, t_embed, v_pos, v_neg, t_pos, t_neg, labels)

    root = jax.random.PRNGKey(0)
    k1, k2 = jax.random.split(root)

    cases = [
        # (key, B, D, C,   K,   max_tile_c)
        (k1, 8, 32, 16, 128, 4096),   # single resident class tile
        (k2, 8, 32, 520, 128, 128),   # multi-tile, 2-way class split, ragged padding
    ]
    for key, B, D, C, K, max_tile_c in cases:
        args = _make_inputs(key, B, D, C, K)
        run = jax.jit(functools.partial(loss_computation, max_tile_c=max_tile_c))
        got = jax.block_until_ready(run(*args))
        want = jax.block_until_ready(jax.jit(_reference_losses)(*args))
        for name in ("instance_loss", "infonce_loss", "global_align_loss"):
            g, w = float(got[name]), float(want[name])
            # bf16 projection quantization only touches instance_loss; 5e-3 covers it.
            assert abs(g - w) <= 5e-3 + 5e-3 * abs(w), (name, g, w, (B, D, C, K))

    print("KERNEL_OK")
</pallas_src>

<mosaic_0001>
module attributes {stable_mosaic.version = 11 : i64} {
  func.func @_fused_loss_kernel(%arg0: i32, %arg1: i32, %arg2: memref<16x32xf32, #tpu.memory_space<vmem>>, %arg3: memref<32x128xbf16, #tpu.memory_space<vmem>>, %arg4: memref<16x1xi32, #tpu.memory_space<vmem>>, %arg5: memref<16x1xf32, #tpu.memory_space<vmem>>, %arg6: memref<16x128xf32, #tpu.memory_space<vmem>>, %arg7: memref<16x128xf32, #tpu.memory_space<vmem>>, %arg8: memref<16x1xf32, #tpu.memory_space<vmem>>, %arg9: memref<16x1xf32, #tpu.memory_space<vmem>>, %arg10: memref<16x1xf32, #tpu.memory_space<vmem>>, %arg11: memref<16x1xf32, #tpu.memory_space<vmem>>) attributes {dimension_semantics = [#tpu.dimension_semantics<parallel>, #tpu.dimension_semantics<arbitrary>], iteration_bounds = array<i64: 1, 1>, scalar_prefetch = 0 : i64, scratch_operands = 4 : i64, tpu.core_type = #tpu.core_type<tc>, window_params = [{pipeline_mode = #tpu.pipeline_mode<synchronous>, transform_indices = @transform_0, window_bounds = array<i64: 16, 32>}, {transform_indices = @transform_1, window_bounds = array<i64: 32, 128>}, {pipeline_mode = #tpu.pipeline_mode<synchronous>, transform_indices = @transform_2, window_bounds = array<i64: 16, 1>}, {pipeline_mode = #tpu.pipeline_mode<synchronous>, transform_indices = @transform_3, window_bounds = array<i64: 16, 1>}, {pipeline_mode = #tpu.pipeline_mode<synchronous>, transform_indices = @transform_4, window_bounds = array<i64: 16, 128>}, {transform_indices = @transform_5, window_bounds = array<i64: 16, 128>}]} {
    %c0_i32 = arith.constant 0 : i32
    %0 = arith.cmpi eq, %arg1, %c0_i32 : i32
    %1 = arith.extui %0 : i1 to i32
    %c0_i32_0 = arith.constant 0 : i32
    %2 = arith.cmpi ne, %1, %c0_i32_0 : i32
    scf.if %2 {
      %cst_26 = arith.constant -1.000000e+30 : f32
      %44 = vector.broadcast %cst_26 : f32 to vector<16x1xf32>
      %c0_27 = arith.constant 0 : index
      %c0_28 = arith.constant 0 : index
      %45 = vector.load %arg8[%c0_27, %c0_28] : memref<16x1xf32, #tpu.memory_space<vmem>>, vector<16x1xf32>
      tpu.vector_store %arg8[%c0_27, %c0_28], %44 {strides = array<i32>} : memref<16x1xf32, #tpu.memory_space<vmem>>, vector<16x1xf32>,
      %cst_29 = arith.constant 0.000000e+00 : f32
      %46 = vector.broadcast %cst_29 : f32 to vector<16x1xf32>
      %c0_30 = arith.constant 0 : index
      %c0_31 = arith.constant 0 : index
      %47 = vector.load %arg9[%c0_30, %c0_31] : memref<16x1xf32, #tpu.memory_space<vmem>>, vector<16x1xf32>
      tpu.vector_store %arg9[%c0_30, %c0_31], %46 {strides = array<i32>} : memref<16x1xf32, #tpu.memory_space<vmem>>, vector<16x1xf32>,
      %cst_32 = arith.constant 0.000000e+00 : f32
      %48 = vector.broadcast %cst_32 : f32 to vector<16x1xf32>
      %c0_33 = arith.constant 0 : index
      %c0_34 = arith.constant 0 : index
      %49 = vector.load %arg10[%c0_33, %c0_34] : memref<16x1xf32, #tpu.memory_space<vmem>>, vector<16x1xf32>
      tpu.vector_store %arg10[%c0_33, %c0_34], %48 {strides = array<i32>} : memref<16x1xf32, #tpu.memory_space<vmem>>, vector<16x1xf32>,
      %cst_35 = arith.constant 0.000000e+00 : f32
      %50 = vector.broadcast %cst_35 : f32 to vector<16x1xf32>
      %c0_36 = arith.constant 0 : index
      %c0_37 = arith.constant 0 : index
      %51 = vector.load %arg11[%c0_36, %c0_37] : memref<16x1xf32, #tpu.memory_space<vmem>>, vector<16x1xf32>
      tpu.vector_store %arg11[%c0_36, %c0_37], %50 {strides = array<i32>} : memref<16x1xf32, #tpu.memory_space<vmem>>, vector<16x1xf32>,
      %cst_38 = arith.constant 0.000000e+00 : f32
      %52 = vector.broadcast %cst_38 : f32 to vector<16x128xf32>
      %c0_39 = arith.constant 0 : index
      %c0_40 = arith.constant 0 : index
      %53 = vector.load %arg7[%c0_39, %c0_40] : memref<16x128xf32, #tpu.memory_space<vmem>>, vector<16x128xf32>
      tpu.vector_store %arg7[%c0_39, %c0_40], %52 {strides = array<i32>} : memref<16x128xf32, #tpu.memory_space<vmem>>, vector<16x128xf32>,
    } else {
    }
    %c0_i32_1 = arith.constant 0 : i32
    %3 = arith.cmpi eq, %arg0, %c0_i32_1 : i32
    %c0_i32_2 = arith.constant 0 : i32
    %4 = arith.cmpi eq, %arg1, %c0_i32_2 : i32
    %5 = arith.andi %3, %4 : i1
    %6 = arith.extui %5 : i1 to i32
    %c0_i32_3 = arith.constant 0 : i32
    %7 = arith.cmpi ne, %6, %c0_i32_3 : i32
    scf.if %7 {
      %c0_26 = arith.constant 0 : index
      %c0_27 = arith.constant 0 : index
      %44 = vector.load %arg5[%c0_26, %c0_27] : memref<16x1xf32, #tpu.memory_space<vmem>>, vector<16x1xf32>
      %cst_28 = arith.constant 14.2857141 : f32
      %45 = vector.broadcast %cst_28 : f32 to vector<16x1xf32>
      %46 = arith.mulf %44, %45 : vector<16x1xf32>
      %c0_29 = arith.constant 0 : index
      %c0_30 = arith.constant 0 : index
      %47 = vector.load %arg6[%c0_29, %c0_30] : memref<16x128xf32, #tpu.memory_space<vmem>>, vector<16x128xf32>
      %cst_31 = arith.constant 14.2857141 : f32
      %48 = vector.broadcast %cst_31 : f32 to vector<16x128xf32>
      %49 = arith.mulf %47, %48 : vector<16x128xf32>
      %cst_32 = arith.constant dense<0xFF800000> : vector<16xf32>
      %50 = vector.multi_reduction <maximumf>, %49, %cst_32 [1] : vector<16x128xf32> to vector<16xf32>
      %51 = vector.shape_cast %50 : vector<16xf32> to vector<16x1xf32>
      %52 = arith.maximumf %46, %51 : vector<16x1xf32>
      %53 = arith.subf %46, %52 : vector<16x1xf32>
      %54 = math.exp %53 : vector<16x1xf32>
      %55 = vector.broadcast %52 : vector<16x1xf32> to vector<16x128xf32>
      %56 = arith.subf %49, %55 : vector<16x128xf32>
      %57 = math.exp %56 : vector<16x128xf32>
      %cst_33 = arith.constant dense<0.000000e+00> : vector<16xf32>
      %58 = vector.multi_reduction <add>, %57, %cst_33 [1] : vector<16x128xf32> to vector<16xf32>
      %59 = vector.shape_cast %58 : vector<16xf32> to vector<16x1xf32>
      %60 = arith.addf %54, %59 : vector<16x1xf32>
      %61 = math.log %60 : vector<16x1xf32>
      %62 = arith.addf %52, %61 : vector<16x1xf32>
      %63 = arith.subf %62, %46 : vector<16x1xf32>
      %64 = vector.shape_cast %63 : vector<16x1xf32> to vector<1x16x1xf32>
      %cst_34 = arith.constant dense<0.000000e+00> : vector<1xf32>
      %65 = vector.multi_reduction <add>, %64, %cst_34 [1, 2] : vector<1x16x1xf32> to vector<1xf32>
      %66 = vector.shape_cast %65 : vector<1xf32> to vector<1x1x1xf32>
      %67 = vector.extract %66[0, 0, 0] : f32 from vector<1x1x1xf32>
      %cst_35 = arith.constant 8.000000e+00 : f32
      %68 = arith.divf %67, %cst_35 : f32
      %c0_36 = arith.constant 0 : index
      %c0_37 = arith.constant 0 : index
      %69 = vector.load %arg2[%c0_36, %c0_37] : memref<16x32xf32, #tpu.memory_space<vmem>>, vector<16x32xf32>
      %70 = vector.extract_strided_slice %69 {offsets = [0, 0], sizes = [8, 32], strides = [1, 1]} : vector<16x32xf32> to vector<8x32xf32>
      %71 = vector.extract_strided_slice %69 {offsets = [8, 0], sizes = [8, 32], strides = [1, 1]} : vector<16x32xf32> to vector<8x32xf32>
      %72 = arith.mulf %70, %70 : vector<8x32xf32>
      %cst_38 = arith.constant dense<0.000000e+00> : vector<8xf32>
      %73 = vector.multi_reduction <add>, %72, %cst_38 [1] : vector<8x32xf32> to vector<8xf32>
      %74 = vector.shape_cast %73 : vector<8xf32> to vector<8x1xf32>
      %cst_39 = arith.constant 1.000000e-24 : f32
      %75 = vector.broadcast %cst_39 : f32 to vector<8x1xf32>
      %76 = arith.maximumf %74, %75 : vector<8x1xf32>
      %77 = math.rsqrt %76 : vector<8x1xf32>
      %78 = vector.broadcast %77 : vector<8x1xf32> to vector<8x32xf32>
      %79 = arith.mulf %70, %78 : vector<8x32xf32>
      %80 = arith.mulf %71, %71 : vector<8x32xf32>
      %cst_40 = arith.constant dense<0.000000e+00> : vector<8xf32>
      %81 = vector.multi_reduction <add>, %80, %cst_40 [1] : vector<8x32xf32> to vector<8xf32>
      %82 = vector.shape_cast %81 : vector<8xf32> to vector<8x1xf32>
      %cst_41 = arith.constant 1.000000e-24 : f32
      %83 = vector.broadcast %cst_41 : f32 to vector<8x1xf32>
      %84 = arith.maximumf %82, %83 : vector<8x1xf32>
      %85 = math.rsqrt %84 : vector<8x1xf32>
      %86 = vector.broadcast %85 : vector<8x1xf32> to vector<8x32xf32>
      %87 = arith.mulf %71, %86 : vector<8x32xf32>
      %cst_42 = arith.constant dense<0.000000e+00> : vector<8x8xf32>
      %88 = tpu.matmul %79, %87, %cst_42 {dimension_numbers = #tpu.dot_dimension_numbers<[1], [1], [0], [0], [0, 0, 1, 0], [], []>} : vector<8x32xf32>, vector<8x32xf32>, vector<8x8xf32> -> vector<8x8xf32>
      %c0_43 = arith.constant 0 : index
      %c0_44 = arith.constant 0 : index
      %89 = vector.load %arg4[%c0_43, %c0_44] : memref<16x1xi32, #tpu.memory_space<vmem>>, vector<16x1xi32>
      %90 = vector.extract_strided_slice %89 {offsets = [0, 0], sizes = [8, 1], strides = [1, 1]} : vector<16x1xi32> to vector<8x1xi32>
      %91 = tpu.transpose %90, [1, 0] : vector<8x1xi32> -> vector<1x8xi32>
      %92 = vector.broadcast %90 : vector<8x1xi32> to vector<8x8xi32>
      %93 = vector.broadcast %91 : vector<1x8xi32> to vector<8x8xi32>
      %94 = arith.cmpi eq, %92, %93 : vector<8x8xi32>
      %cst_45 = arith.constant 6.000000e-01 : f32
      %95 = vector.broadcast %cst_45 : f32 to vector<8x8xf32>
      %96 = arith.subf %88, %95 : vector<8x8xf32>
      %cst_46 = arith.constant -1.000000e+01 : f32
      %97 = vector.broadcast %cst_46 : f32 to vector<8x8xf32>
      %98 = arith.mulf %97, %96 : vector<8x8xf32>
      %cst_47 = arith.constant 4.000000e-01 : f32
      %99 = vector.broadcast %cst_47 : f32 to vector<8x8xf32>
      %100 = arith.subf %88, %99 : vector<8x8xf32>
      %cst_48 = arith.constant 4.000000e+01 : f32
      %101 = vector.broadcast %cst_48 : f32 to vector<8x8xf32>
      %102 = arith.mulf %101, %100 : vector<8x8xf32>
      %103 = arith.select %94, %98, %102 : vector<8x8xi1>, vector<8x8xf32>
      %cst_49 = arith.constant 0.000000e+00 : f32
      %104 = vector.broadcast %cst_49 : f32 to vector<8x8xf32>
      %105 = arith.maximumf %103, %104 : vector<8x8xf32>
      %106 = math.absf %103 : vector<8x8xf32>
      %cst_50 = arith.constant 0.000000e+00 : f32
      %107 = vector.broadcast %cst_50 : f32 to vector<8x8xf32>
      %108 = arith.subf %107, %106 : vector<8x8xf32>
      %109 = math.exp %108 : vector<8x8xf32>
      %110 = math.log1p %109 : vector<8x8xf32>
      %111 = arith.addf %105, %110 : vector<8x8xf32>
      %112 = vector.shape_cast %111 : vector<8x8xf32> to vector<1x8x8xf32>
      %cst_51 = arith.constant dense<0.000000e+00> : vector<1xf32>
      %113 = vector.multi_reduction <add>, %112, %cst_51 [1, 2] : vector<1x8x8xf32> to vector<1xf32>
      %114 = vector.shape_cast %113 : vector<1xf32> to vector<1x1x1xf32>
      %115 = vector.extract %114[0, 0, 0] : f32 from vector<1x1x1xf32>
      %cst_52 = arith.constant 2.000000e+00 : f32
      %116 = arith.mulf %115, %cst_52 : f32
      %cst_53 = arith.constant 8.000000e+00 : f32
      %117 = arith.divf %116, %cst_53 : f32
      %118 = tpu.iota {dimensions = array<i32: 1>} : vector<16x128xi32>
      %c4_i32 = arith.constant 4 : i32
      %119 = vector.broadcast %c4_i32 : i32 to vector<16x128xi32>
      %120 = arith.cmpi eq, %118, %119 : vector<16x128xi32>
      %c5_i32 = arith.constant 5 : i32
      %121 = vector.broadcast %c5_i32 : i32 to vector<16x128xi32>
      %122 = arith.cmpi eq, %118, %121 : vector<16x128xi32>
      %cst_54 = arith.constant 0.000000e+00 : f32
      %123 = vector.broadcast %117 : f32 to vector<16x128xf32>
      %124 = vector.broadcast %cst_54 : f32 to vector<16x128xf32>
      %125 = arith.select %122, %123, %124 : vector<16x128xi1>, vector<16x128xf32>
      %126 = vector.broadcast %68 : f32 to vector<16x128xf32>
      %127 = arith.select %120, %126, %125 : vector<16x128xi1>, vector<16x128xf32>
      %c0_55 = arith.constant 0 : index
      %c0_56 = arith.constant 0 : index
      %128 = vector.load %arg7[%c0_55, %c0_56] : memref<16x128xf32, #tpu.memory_space<vmem>>, vector<16x128xf32>
      tpu.vector_store %arg7[%c0_55, %c0_56], %127 {strides = array<i32>} : memref<16x128xf32, #tpu.memory_space<vmem>>, vector<16x128xf32>,
    } else {
    }
    %c1_i32 = arith.constant 1 : i32
    %8 = arith.muli %arg0, %c1_i32 : i32
    %9 = arith.addi %8, %arg1 : i32
    %c0 = arith.constant 0 : index
    %c0_4 = arith.constant 0 : index
    %10 = vector.load %arg2[%c0, %c0_4] : memref<16x32xf32, #tpu.memory_space<vmem>>, vector<16x32xf32>
    %c0_5 = arith.constant 0 : index
    %c0_6 = arith.constant 0 : index
    %11 = vector.load %arg3[%c0_5, %c0_6] : memref<32x128xbf16, #tpu.memory_space<vmem>>, vector<32x128xbf16>
    %12 = arith.extf %11 : vector<32x128xbf16> to vector<32x128xf32>
    %cst = arith.constant dense<0.000000e+00> : vector<16x128xf32>
    %13 = tpu.matmul %10, %12, %cst {dimension_numbers = #tpu.dot_dimension_numbers<[1], [0], [0], [1], [0, 0, 1, 1], [], []>} : vector<16x32xf32>, vector<32x128xf32>, vector<16x128xf32> -> vector<16x128xf32>
    %14 = tpu.iota {dimensions = array<i32: 1>} : vector<16x128xi32>
    %c0_7 = arith.constant 0 : index
    %c0_8 = arith.constant 0 : index
    %15 = vector.load %arg10[%c0_7, %c0_8] : memref<16x1xf32, #tpu.memory_space<vmem>>, vector<16x1xf32>
    %cst_9 = arith.constant dense<0.000000e+00> : vector<16xf32>
    %16 = vector.multi_reduction <add>, %13, %cst_9 [1] : vector<16x128xf32> to vector<16xf32>
    %17 = vector.shape_cast %16 : vector<16xf32> to vector<16x1xf32>
    %18 = arith.addf %15, %17 : vector<16x1xf32>
    %c0_10 = arith.constant 0 : index
    %c0_11 = arith.constant 0 : index
    %19 = vector.load %arg10[%c0_10, %c0_11] : memref<16x1xf32, #tpu.memory_space<vmem>>, vector<16x1xf32>
    tpu.vector_store %arg10[%c0_10, %c0_11], %18 {strides = array<i32>} : memref<16x1xf32, #tpu.memory_space<vmem>>, vector<16x1xf32>,
    %c0_12 = arith.constant 0 : index
    %c0_13 = arith.constant 0 : index
    %20 = vector.load %arg4[%c0_12, %c0_13] : memref<16x1xi32, #tpu.memory_space<vmem>>, vector<16x1xi32>
    %c128_i32 = arith.constant 128 : i32
    %21 = arith.muli %9, %c128_i32 : i32
    %22 = vector.broadcast %21 : i32 to vector<16x1xi32>
    %23 = arith.subi %20, %22 : vector<16x1xi32>
    %c0_14 = arith.constant 0 : index
    %c0_15 = arith.constant 0 : index
    %24 = vector.load %arg11[%c0_14, %c0_15] : memref<16x1xf32, #tpu.memory_space<vmem>>, vector<16x1xf32>
    %25 = vector.broadcast %23 : vector<16x1xi32> to vector<16x128xi32>
    %26 = arith.cmpi eq, %14, %25 : vector<16x128xi32>
    %cst_16 = arith.constant 0.000000e+00 : f32
    %27 = vector.broadcast %cst_16 : f32 to vector<16x128xf32>
    %28 = arith.select %26, %13, %27 : vector<16x128xi1>, vector<16x128xf32>
    %cst_17 = arith.constant dense<0.000000e+00> : vector<16xf32>
    %29 = vector.multi_reduction <add>, %28, %cst_17 [1] : vector<16x128xf32> to vector<16xf32>
    %30 = vector.shape_cast %29 : vector<16xf32> to vector<16x1xf32>
    %31 = arith.addf %24, %30 : vector<16x1xf32>
    %c0_18 = arith.constant 0 : index
    %c0_19 = arith.constant 0 : index
    %32 = vector.load %arg11[%c0_18, %c0_19] : memref<16x1xf32, #tpu.memory_space<vmem>>, vector<16x1xf32>
    tpu.vector_store %arg11[%c0_18, %c0_19], %31 {strides = array<i32>} : memref<16x1xf32, #tpu.memory_space<vmem>>, vector<16x1xf32>,
    %c128_i32_20 = arith.constant 128 : i32
    %33 = arith.muli %9, %c128_i32_20 : i32
    %c128_i32_21 = arith.constant 128 : i32
    %34 = arith.addi %33, %c128_i32_21 : i32
    %c16_i32 = arith.constant 16 : i32
    %35 = arith.cmpi sgt, %34, %c16_i32 : i32
    %true = arith.constant true
    %36 = arith.xori %35, %true : i1
    %37 = arith.extui %36 : i1 to i32
    %c0_i32_22 = arith.constant 0 : i32
    %38 = arith.cmpi ne, %37, %c0_i32_22 : i32
    scf.if %38 {
      %c0_26 = arith.constant 0 : index
      %c0_27 = arith.constant 0 : index
      %44 = vector.load %arg8[%c0_26, %c0_27] : memref<16x1xf32, #tpu.memory_space<vmem>>, vector<16x1xf32>
      %cst_28 = arith.constant dense<0xFF800000> : vector<16xf32>
      %45 = vector.multi_reduction <maximumf>, %13, %cst_28 [1] : vector<16x128xf32> to vector<16xf32>
      %46 = vector.shape_cast %45 : vector<16xf32> to vector<16x1xf32>
      %47 = arith.maximumf %44, %46 : vector<16x1xf32>
      %c0_29 = arith.constant 0 : index
      %c0_30 = arith.constant 0 : index
      %48 = vector.load %arg9[%c0_29, %c0_30] : memref<16x1xf32, #tpu.memory_space<vmem>>, vector<16x1xf32>
      %49 = arith.subf %44, %47 : vector<16x1xf32>
      %50 = math.exp %49 : vector<16x1xf32>
      %51 = arith.mulf %48, %50 : vector<16x1xf32>
      %52 = vector.broadcast %47 : vector<16x1xf32> to vector<16x128xf32>
      %53 = arith.subf %13, %52 : vector<16x128xf32>
      %54 = math.exp %53 : vector<16x128xf32>
      %cst_31 = arith.constant dense<0.000000e+00> : vector<16xf32>
      %55 = vector.multi_reduction <add>, %54, %cst_31 [1] : vector<16x128xf32> to vector<16xf32>
      %56 = vector.shape_cast %55 : vector<16xf32> to vector<16x1xf32>
      %57 = arith.addf %51, %56 : vector<16x1xf32>
      %c0_32 = arith.constant 0 : index
      %c0_33 = arith.constant 0 : index
      %58 = vector.load %arg9[%c0_32, %c0_33] : memref<16x1xf32, #tpu.memory_space<vmem>>, vector<16x1xf32>
      tpu.vector_store %arg9[%c0_32, %c0_33], %57 {strides = array<i32>} : memref<16x1xf32, #tpu.memory_space<vmem>>, vector<16x1xf32>,
      %c0_34 = arith.constant 0 : index
      %c0_35 = arith.constant 0 : index
      %59 = vector.load %arg8[%c0_34, %c0_35] : memref<16x1xf32, #tpu.memory_space<vmem>>, vector<16x1xf32>
      tpu.vector_store %arg8[%c0_34, %c0_35], %47 {strides = array<i32>} : memref<16x1xf32, #tpu.memory_space<vmem>>, vector<16x1xf32>,
    } else {
    }
    %39 = arith.extui %35 : i1 to i32
    %c0_i32_23 = arith.constant 0 : i32
    %40 = arith.cmpi ne, %39, %c0_i32_23 : i32
    scf.if %40 {
      %c128_i32_26 = arith.constant 128 : i32
      %44 = arith.muli %9, %c128_i32_26 : i32
      %c16_i32_27 = arith.constant 16 : i32
      %45 = arith.subi %c16_i32_27, %44 : i32
      %46 = vector.broadcast %45 : i32 to vector<16x128xi32>
      %47 = arith.cmpi slt, %14, %46 : vector<16x128xi32>
      %cst_28 = arith.constant -1.000000e+30 : f32
      %48 = vector.broadcast %cst_28 : f32 to vector<16x128xf32>
      %49 = arith.select %47, %13, %48 : vector<16x128xi1>, vector<16x128xf32>
      %c0_29 = arith.constant 0 : index
      %c0_30 = arith.constant 0 : index
      %50 = vector.load %arg8[%c0_29, %c0_30] : memref<16x1xf32, #tpu.memory_space<vmem>>, vector<16x1xf32>
      %cst_31 = arith.constant dense<0xFF800000> : vector<16xf32>
      %51 = vector.multi_reduction <maximumf>, %49, %cst_31 [1] : vector<16x128xf32> to vector<16xf32>
      %52 = vector.shape_cast %51 : vector<16xf32> to vector<16x1xf32>
      %53 = arith.maximumf %50, %52 : vector<16x1xf32>
      %c0_32 = arith.constant 0 : index
      %c0_33 = arith.constant 0 : index
      %54 = vector.load %arg9[%c0_32, %c0_33] : memref<16x1xf32, #tpu.memory_space<vmem>>, vector<16x1xf32>
      %55 = arith.subf %50, %53 : vector<16x1xf32>
      %56 = math.exp %55 : vector<16x1xf32>
      %57 = arith.mulf %54, %56 : vector<16x1xf32>
      %58 = vector.broadcast %53 : vector<16x1xf32> to vector<16x128xf32>
      %59 = arith.subf %49, %58 : vector<16x128xf32>
      %60 = math.exp %59 : vector<16x128xf32>
      %cst_34 = arith.constant dense<0.000000e+00> : vector<16xf32>
      %61 = vector.multi_reduction <add>, %60, %cst_34 [1] : vector<16x128xf32> to vector<16xf32>
      %62 = vector.shape_cast %61 : vector<16xf32> to vector<16x1xf32>
      %63 = arith.addf %57, %62 : vector<16x1xf32>
      %c0_35 = arith.constant 0 : index
      %c0_36 = arith.constant 0 : index
      %64 = vector.load %arg9[%c0_35, %c0_36] : memref<16x1xf32, #tpu.memory_space<vmem>>, vector<16x1xf32>
      tpu.vector_store %arg9[%c0_35, %c0_36], %63 {strides = array<i32>} : memref<16x1xf32, #tpu.memory_space<vmem>>, vector<16x1xf32>,
      %c0_37 = arith.constant 0 : index
      %c0_38 = arith.constant 0 : index
      %65 = vector.load %arg8[%c0_37, %c0_38] : memref<16x1xf32, #tpu.memory_space<vmem>>, vector<16x1xf32>
      tpu.vector_store %arg8[%c0_37, %c0_38], %53 {strides = array<i32>} : memref<16x1xf32, #tpu.memory_space<vmem>>, vector<16x1xf32>,
    } else {
    }
    %c0_i32_24 = arith.constant 0 : i32
    %41 = arith.cmpi eq, %arg1, %c0_i32_24 : i32
    %42 = arith.extui %41 : i1 to i32
    %c0_i32_25 = arith.constant 0 : i32
    %43 = arith.cmpi ne, %42, %c0_i32_25 : i32
    scf.if %43 {
      %44 = tpu.iota {dimensions = array<i32: 1>} : vector<16x128xi32>
      %c0_i32_26 = arith.constant 0 : i32
      %45 = vector.broadcast %c0_i32_26 : i32 to vector<16x128xi32>
      %46 = arith.cmpi eq, %44, %45 : vector<16x128xi32>
      %c0_27 = arith.constant 0 : index
      %c0_28 = arith.constant 0 : index
      %47 = vector.load %arg8[%c0_27, %c0_28] : memref<16x1xf32, #tpu.memory_space<vmem>>, vector<16x1xf32>
      %c1_i32_29 = arith.constant 1 : i32
      %48 = vector.broadcast %c1_i32_29 : i32 to vector<16x128xi32>
      %49 = arith.cmpi eq, %44, %48 : vector<16x128xi32>
      %c0_30 = arith.constant 0 : index
      %c0_31 = arith.constant 0 : index
      %50 = vector.load %arg9[%c0_30, %c0_31] : memref<16x1xf32, #tpu.memory_space<vmem>>, vector<16x1xf32>
      %c2_i32 = arith.constant 2 : i32
      %51 = vector.broadcast %c2_i32 : i32 to vector<16x128xi32>
      %52 = arith.cmpi eq, %44, %51 : vector<16x128xi32>
      %c0_32 = arith.constant 0 : index
      %c0_33 = arith.constant 0 : index
      %53 = vector.load %arg10[%c0_32, %c0_33] : memref<16x1xf32, #tpu.memory_space<vmem>>, vector<16x1xf32>
      %c3_i32 = arith.constant 3 : i32
      %54 = vector.broadcast %c3_i32 : i32 to vector<16x128xi32>
      %55 = arith.cmpi eq, %44, %54 : vector<16x128xi32>
      %c0_34 = arith.constant 0 : index
      %c0_35 = arith.constant 0 : index
      %56 = vector.load %arg11[%c0_34, %c0_35] : memref<16x1xf32, #tpu.memory_space<vmem>>, vector<16x1xf32>
      %c0_36 = arith.constant 0 : index
      %c0_37 = arith.constant 0 : index
      %57 = vector.load %arg7[%c0_36, %c0_37] : memref<16x128xf32, #tpu.memory_space<vmem>>, vector<16x128xf32>
      %58 = vector.shape_cast %56 : vector<16x1xf32> to vector<16x1xf32>
      %59 = vector.broadcast %58 : vector<16x1xf32> to vector<16x128xf32>
      %60 = arith.select %55, %59, %57 : vector<16x128xi1>, vector<16x128xf32>
      %61 = vector.shape_cast %53 : vector<16x1xf32> to vector<16x1xf32>
      %62 = vector.broadcast %61 : vector<16x1xf32> to vector<16x128xf32>
      %63 = arith.select %52, %62, %60 : vector<16x128xi1>, vector<16x128xf32>
      %64 = vector.shape_cast %50 : vector<16x1xf32> to vector<16x1xf32>
      %65 = vector.broadcast %64 : vector<16x1xf32> to vector<16x128xf32>
      %66 = arith.select %49, %65, %63 : vector<16x128xi1>, vector<16x128xf32>
      %67 = vector.shape_cast %47 : vector<16x1xf32> to vector<16x1xf32>
      %68 = vector.broadcast %67 : vector<16x1xf32> to vector<16x128xf32>
      %69 = arith.select %46, %68, %66 : vector<16x128xi1>, vector<16x128xf32>
      %c0_38 = arith.constant 0 : index
      %c0_39 = arith.constant 0 : index
      %70 = vector.load %arg7[%c0_38, %c0_39] : memref<16x128xf32, #tpu.memory_space<vmem>>, vector<16x128xf32>
      tpu.vector_store %arg7[%c0_38, %c0_39], %69 {strides = array<i32>} : memref<16x128xf32, #tpu.memory_space<vmem>>, vector<16x128xf32>,
    } else {
    }
    return
  }
  func.func @transform_0(%arg0: i32, %arg1: i32) -> (i32, i32) {
    %c0_i32 = arith.constant 0 : i32
    %c0_i32_0 = arith.constant 0 : i32
    %c0_i32_1 = arith.constant 0 : i32
    return %c0_i32, %c0_i32_0 : i32, i32
  }
  func.func @transform_1(%arg0: i32, %arg1: i32) -> (i32, i32) {
    %c1_i32 = arith.constant 1 : i32
    %0 = arith.muli %arg0, %c1_i32 : i32
    %1 = arith.addi %0, %arg1 : i32
    %c0_i32 = arith.constant 0 : i32
    %c0_i32_0 = arith.constant 0 : i32
    return %c0_i32, %1 : i32, i32
  }
  func.func @transform_2(%arg0: i32, %arg1: i32) -> (i32, i32) {
    %c0_i32 = arith.constant 0 : i32
    %c0_i32_0 = arith.constant 0 : i32
    %c0_i32_1 = arith.constant 0 : i32
    return %c0_i32, %c0_i32_0 : i32, i32
  }
  func.func @transform_3(%arg0: i32, %arg1: i32) -> (i32, i32) {
    %c0_i32 = arith.constant 0 : i32
    %c0_i32_0 = arith.constant 0 : i32
    %c0_i32_1 = arith.constant 0 : i32
    return %c0_i32, %c0_i32_0 : i32, i32
  }
  func.func @transform_4(%arg0: i32, %arg1: i32) -> (i32, i32) {
    %c0_i32 = arith.constant 0 : i32
    %c0_i32_0 = arith.constant 0 : i32
    %c0_i32_1 = arith.constant 0 : i32
    return %c0_i32, %c0_i32_0 : i32, i32
  }
  func.func @transform_5(%arg0: i32, %arg1: i32) -> (i32, i32) {
    %c0_i32 = arith.constant 0 : i32
    %c0_i32_0 = arith.constant 0 : i32
    return %arg0, %c0_i32 : i32, i32
  }
}

</mosaic_0001>

<llo_original>
// kernel: loss_computation.1
$region0: #{loss_computation.1}
  #allocation0 [shape = 'u32[]', space=smem, size = 0x4, offset = 0x4, fixed_abs, tag = 'smem constant byte address 0x4 - core index']
  #allocation1 [shape = 'u32[144,128]{1,0:T(1,128)}', space=vmem, size = 0x12000, scoped, tag = 'internal scratch']
  #allocation2 [shape = 'f32[16,1]{1,0:T(8,128)}', space=vmem, size = 0x2000, scoped, tag = 'scratch operand']
  #allocation3 [shape = 'f32[16,1]{1,0:T(8,128)}', space=vmem, size = 0x2000, scoped, tag = 'scratch operand']
  #allocation4 [shape = 'f32[16,1]{1,0:T(8,128)}', space=vmem, size = 0x2000, scoped, tag = 'scratch operand']
  #allocation5 [shape = 'f32[16,1]{1,0:T(8,128)}', space=vmem, size = 0x2000, scoped, tag = 'scratch operand']
  %s0 = inlined_call_operand.vmem [shape: f32[16,32], index: 0, kind: input, shape index: {}]
  %s1 = inlined_call_operand.vmem [shape: bf16[32,128], index: 1, kind: input, shape index: {}]
  %s2 = inlined_call_operand.vmem [shape: s32[16,1], index: 2, kind: input, shape index: {}]
  %s3 = inlined_call_operand.vmem [shape: f32[16,1], index: 3, kind: input, shape index: {}]
  %s4 = inlined_call_operand.vmem [shape: f32[16,128], index: 4, kind: input, shape index: {}]
  %s5 = inlined_call_operand.vmem [shape: f32[16,128], index: 5, kind: output, shape index: {}]
  %s6 = sld [smem:[#allocation0]]
  $region50: #{loss_computation.1} parent=0
    _
  %s8 = ssub.s32 1, %s6
  %s9 = scalar_select 0, %s8, %s6
  // Predicated region
  $region2: #{loss_computation.1} parent=0 // pred_check
    _
  $region3: #{loss_computation.1} parent=0 // pred_check_branch
    %11 = sbr.rel (0) target = $region5
  $region4: #{loss_computation.1} parent=0 // pred_region
    _
  $region5: #{loss_computation.1} parent=0 // pred_fallthru
    _
  // Predicated region
  $region6: #{loss_computation.1} parent=0 // pred_check
    _
  $region7: #{loss_computation.1} parent=0 // pred_check_branch
    %13 = sbr.rel (0) target = $region9
  $region8: #{loss_computation.1} parent=0 // pred_region
    %s14 = sadd.s32 0, 0
    %p15 = scmp.lt.s32.totalorder %s14, 0
    %s16 = scalar_select %p15, %s14, 0
    %s17 = smul.addr %s16, 4
    %s18 = scalar_lea.vmem %s1, %s17
    %s19 = sadd.s32 0, 0
  $region9: #{loss_computation.1} parent=0 // pred_fallthru
    _
  // Predicated region
  $region10: #{loss_computation.1} parent=0 // pred_check
    _
  $region11: #{loss_computation.1} parent=0 // pred_check_branch
    %21 = sbr.rel (0) target = $region13
  $region12: #{loss_computation.1} parent=0 // pred_region
    _
  $region13: #{loss_computation.1} parent=0 // pred_fallthru
    _
  // Predicated region
  $region14: #{loss_computation.1} parent=0 // pred_check
    _
  $region15: #{loss_computation.1} parent=0 // pred_check_branch
    %23 = sbr.rel (0) target = $region17
  $region16: #{loss_computation.1} parent=0 // pred_region
    _
  $region17: #{loss_computation.1} parent=0 // pred_fallthru
    _
  // Predicated region
  $region18: #{loss_computation.1} parent=0 // pred_check
    _
  $region19: #{loss_computation.1} parent=0 // pred_check_branch
    %25 = sbr.rel (0) target = $region21
  $region20: #{loss_computation.1} parent=0 // pred_region
    _
  $region21: #{loss_computation.1} parent=0 // pred_fallthru
    _
  %s26 = sadd.s32 0, 0
  %p27 = scmp.lt.s32.totalorder %s26, 0
  %s28 = scalar_select %p27, %s26, 0
  %s29 = smul.addr %s28, 4
  %s30 = scalar_lea.vmem %s1, %s29
  %s31 = sadd.s32 0, 0
  %p32 = scmp.lt.s32.totalorder %s31, 0
  %s33 = scalar_select %p32, %s31, 0
  %s34 = smul.addr %s33, 4
  %s35 = scalar_lea.vmem %s1, %s34
  %s36 = sadd.s32 0, 0
  %p37 = scmp.eq.s32.totalorder 0, 0
  // Predicated region
  $region22: #{loss_computation.1} parent=0 // pred_check
    %p38 = pneg %p37
  $region23: #{loss_computation.1} parent=0 // pred_check_branch
    %40 = sbr.rel (%p38) target = $region25
  $region24: #{loss_computation.1} parent=0 // pred_region
    %vm41 = vcmask 7168
    %42 = vst.msk [vmem:[#allocation2] sm:$0xff] %vm41, -1e+30
    %43 = vst.msk [vmem:[#allocation2 + $0x8] sm:$0xff] %vm41, -1e+30
    %44 = vst.msk [vmem:[#allocation3] sm:$0xff] %vm41, 0.0
    %45 = vst.msk [vmem:[#allocation3 + $0x8] sm:$0xff] %vm41, 0.0
    %46 = vst.msk [vmem:[#allocation4] sm:$0xff] %vm41, 0.0
    %47 = vst.msk [vmem:[#allocation4 + $0x8] sm:$0xff] %vm41, 0.0
    %48 = vst.msk [vmem:[#allocation5] sm:$0xff] %vm41, 0.0
    %49 = vst.msk [vmem:[#allocation5 + $0x8] sm:$0xff] %vm41, 0.0
    %50 = vst [vmem:[%s5] sm:$0xff] 0.0
    %51 = vst [vmem:[%s5 + $0x8] sm:$0xff] 0.0
  $region25: #{loss_computation.1} parent=0 // pred_fallthru
    _
  %p52 = scmp.eq.s32.totalorder 0, 0
  %p53 = pnand %p52, %p37
  %p54 = pneg %p53
  // Predicated region
  $region26: #{loss_computation.1} parent=0 // pred_check
    _
  $region27: #{loss_computation.1} parent=0 // pred_check_branch
    %56 = sbr.rel (%p53) target = $region29
  $region28: #{loss_computation.1} parent=0 // pred_region
    %v57 = vld [vmem:[%s3] sm:$0xff]
    %v58 = vld [vmem:[%s3 + $0x8] sm:$0xff]
    %v59 = vmul.f32 %v57, 14.285714
    %v60 = vmul.f32 %v58, 14.285714
    %v61 = vld [vmem:[%s4] sm:$0xff]
    %v62 = vld [vmem:[%s4 + $0x8] sm:$0xff]
    %v63 = vmul.f32 %v61, 14.285714
    %v64 = vmul.f32 %v62, 14.285714
    %65 = vmax.xlane.f32.xlu0 %v63
    %v66 = vpop.xlane.xlu0 %65
    %67 = vmax.xlane.f32.xlu0 %v64
    %v68 = vpop.xlane.xlu0 %67
    %v69 = vmax.f32 %v59, %v66
    %v70 = vmax.f32 %v60, %v68
    %v71 = vsub.f32 %v59, %v69
    %v72 = vsub.f32 %v60, %v70
    %v73 = vmul.f32 %v71, 1.442695
    %v74 = vpow.pop %v73
    %v75 = vmul.f32 %v72, 1.442695
    %v76 = vpow.pop %v75
    %78 = vset.pattern.permute.xlu0 0
    %79 = vperm.xlu0 %78, %v69
    %v80 = vpop.permute.xlu0 %79
    %83 = vset.pattern.permute.xlu0 0
    %84 = vperm.xlu0 %83, %v70
    %v85 = vpop.permute.xlu0 %84
    %v87 = vsub.f32 %v63, %v80
    %v88 = vsub.f32 %v64, %v85
    %v89 = vmul.f32 %v87, 1.442695
    %v90 = vpow.pop %v89
    %v91 = vmul.f32 %v88, 1.442695
    %v92 = vpow.pop %v91
    %93 = vadd.xlane.f32.xlu0 %v90
    %v94 = vpop.xlane.xlu0 %93
    %95 = vadd.xlane.f32.xlu0 %v92
    %v96 = vpop.xlane.xlu0 %95
    %v97 = vadd.f32 %v74, %v94
    %v98 = vadd.f32 %v76, %v96
    %v99 = vlog2.pop %v97
    %v100 = vmul.f32 %v99, 0.6931472
    %v101 = vlog2.pop %v98
    %v102 = vmul.f32 %v101, 0.6931472
    %v103 = vadd.f32 %v69, %v100
    %v104 = vadd.f32 %v70, %v102
    %v105 = vsub.f32 %v103, %v59
    %v106 = vsub.f32 %v104, %v60
    %vm107 = vcmask 7168
    %v108 = vsel %vm107, %v105, 0.0
    %v109 = vsel %vm107, %v106, 0.0
    %v110 = vadd.f32 %v108, %v109
    %111 = vadd.xlane.f32.xlu0 %v110
    %v112 = vpop.xlane.xlu0 %111
    %v113 = vrot.slane %v112, 4
    %v114 = vadd.f32 %v112, %v113
    %v115 = vrot.slane %v114, 2
    %v116 = vadd.f32 %v114, %v115
    %v117 = vrot.slane %v116, 1
    %v118 = vadd.f32 %v116, %v117
    %s119 = vtos %v118
    %v120 = vrcp.pop 8.0
    %s121 = vtos %v120
    %s122 = smul.f32 %s119, %s121
    %v123 = vld [vmem:[%s0] sm:$0xff]
    %v124 = vld [vmem:[%s0 + $0x8] sm:$0xff]
    %v125 = vmul.f32 %v123, %v123
    %vm126 = vcmask 261120
    %v127 = vsel %vm126, %v125, 0.0
    %128 = vadd.xlane.f32.xlu0 %v127
    %v129 = vpop.xlane.xlu0 %128
    %v130 = vmax.f32 %v129, 1e-24
    %v131 = vrsqrt.pop %v130
    %v132 = vmul.f32 %v123, %v131
    %v133 = vmul.f32 %v124, %v124
    %v134 = vsel %vm126, %v133, 0.0
    %135 = vadd.xlane.f32.xlu0 %v134
    %v136 = vpop.xlane.xlu0 %135
    %v137 = vmax.f32 %v136, 1e-24
    %v138 = vrsqrt.pop %v137
    %v139 = vmul.f32 %v124, %v138
    %v141 = vsel %vm126, %v132, 0
    %v144 = vsel %vm126, %v139, 0
    %146 = vmatprep.subr.mxu0 0.0
    %147 = vmatpush1.xpose.msra.mxu0 %v144
    %148 = vmatprep.subr.mxu0 0.0
    %149 = vmatpush1.xpose.msra.mxu0 0.0
    %150 = vmatprep.subr.mxu0 0.0
    %151 = vmatpush1.xpose.msra.mxu0 0.0
    %152 = vmatprep.subr.mxu0 0.0
    %153 = vmatpush1.xpose.msra.mxu0 0.0
    %154 = vmatprep.subr.mxu0 0.0
    %155 = vmatpush1.xpose.msra.mxu0 0.0
    %156 = vmatprep.subr.mxu0 0.0
    %157 = vmatpush1.xpose.msra.mxu0 0.0
    %158 = vmatprep.subr.mxu0 0.0
    %159 = vmatpush1.xpose.msra.mxu0 0.0
    %160 = vmatprep.subr.mxu0 0.0
    %161 = vmatpush1.xpose.msra.mxu0 0.0
    %162 = vmatprep.subr.mxu0 0.0
    %163 = vmatpush1.xpose.msra.mxu0 0.0
    %164 = vmatprep.subr.mxu0 0.0
    %165 = vmatpush1.xpose.msra.mxu0 0.0
    %166 = vmatprep.subr.mxu0 0.0
    %167 = vmatpush1.xpose.msra.mxu0 0.0
    %168 = vmatprep.subr.mxu0 0.0
    %169 = vmatpush1.xpose.msra.mxu0 0.0
    %170 = vmatprep.subr.mxu0 0.0
    %171 = vmatpush1.xpose.msra.mxu0 0.0
    %172 = vmatprep.subr.mxu0 0.0
    %173 = vmatpush1.xpose.msra.mxu0 0.0
    %174 = vmatprep.subr.mxu0 0.0
    %175 = vmatpush1.xpose.msra.mxu0 0.0
    %176 = vmatprep.subr.mxu0 0.0
    %177 = vmatpush1.xpose.msra.mxu0 0.0
    %178 = vmatprep.subr.mxu0 0.0
    %179 = vmatpush1.xpose.msra.mxu0 0.0
    %180 = vmatprep.subr.mxu0 0.0
    %181 = vmatpush1.xpose.msra.mxu0 0.0
    %182 = vmatprep.subr.mxu0 0.0
    %183 = vmatpush1.xpose.msra.mxu0 0.0
    %184 = vmatprep.subr.mxu0 0.0
    %185 = vmatpush1.xpose.msra.mxu0 0.0
    %186 = vmatprep.subr.mxu0 0.0
    %187 = vmatpush1.xpose.msra.mxu0 0.0
    %188 = vmatprep.subr.mxu0 0.0
    %189 = vmatpush1.xpose.msra.mxu0 0.0
    %190 = vmatprep.subr.mxu0 0.0
    %191 = vmatpush1.xpose.msra.mxu0 0.0
    %192 = vmatprep.subr.mxu0 0.0
    %193 = vmatpush1.xpose.msra.mxu0 0.0
    %194 = vmatprep.subr.mxu0 0.0
    %195 = vmatpush1.xpose.msra.mxu0 0.0
    %196 = vmatprep.subr.mxu0 0.0
    %197 = vmatpush1.xpose.msra.mxu0 0.0
    %198 = vmatprep.subr.mxu0 0.0
    %199 = vmatpush1.xpose.msra.mxu0 0.0
    %200 = vmatprep.subr.mxu0 0.0
    %201 = vmatpush1.xpose.msra.mxu0 0.0
    %202 = vmatprep.subr.mxu0 0.0
    %203 = vmatpush1.xpose.msra.mxu0 0.0
    %204 = vmatprep.subr.mxu0 0.0
    %205 = vmatpush1.xpose.msra.mxu0 0.0
    %206 = vmatprep.subr.mxu0 0.0
    %207 = vmatpush1.xpose.msra.mxu0 0.0
    %208 = vmatprep.subr.mxu0 0.0
    %209 = vmatpush1.xpose.msra.mxu0 0.0
    %210 = vmatprep.mubr.f32.mxu0 0.0
    %211 = vmatmul.mubr.f32.gmra.mrb[0].mxu0 %v141
    %v212 = vpop.f32.mrb[0].mxu0
    %v213 = vadd.f32 0.0, %v212
    %v214 = vpop.f32.mrb[0].mxu0
    %215 = vdwg.mxu0
    %v216 = vld [vmem:[%s2] sm:$0xff]
    %217 = vxpose.xlu0.b32.start [1/16] %v216, 128
    %218 = vxpose.xlu0.b32.cont [2/16] 0, 128
    %219 = vxpose.xlu0.b32.cont [3/16] 0, 128
    %220 = vxpose.xlu0.b32.cont [4/16] 0, 128
    %221 = vxpose.xlu0.b32.cont [5/16] 0, 128
    %222 = vxpose.xlu0.b32.cont [6/16] 0, 128
    %223 = vxpose.xlu0.b32.cont [7/16] 0, 128
    %224 = vxpose.xlu0.b32.cont [8/16] 0, 128
    %225 = vxpose.xlu0.b32.cont [9/16] 0, 128
    %226 = vxpose.xlu0.b32.cont [10/16] 0, 128
    %227 = vxpose.xlu0.b32.cont [11/16] 0, 128
    %228 = vxpose.xlu0.b32.cont [12/16] 0, 128
    %229 = vxpose.xlu0.b32.cont [13/16] 0, 128
    %230 = vxpose.xlu0.b32.cont [14/16] 0, 128
    %231 = vxpose.xlu0.b32.cont [15/16] 0, 128
    %232 = vxpose.xlu0.b32.end [16/16] 0, 128
    %v233 = vpop.trf.xlu0
    %v234 = vpop.trf.xlu0
    %v235 = vpop.trf.xlu0
    %v236 = vpop.trf.xlu0
    %v237 = vpop.trf.xlu0
    %v238 = vpop.trf.xlu0
    %v239 = vpop.trf.xlu0
    %v240 = vpop.trf.xlu0
    %v241 = vpop.trf.xlu0
    %v242 = vpop.trf.xlu0
    %v243 = vpop.trf.xlu0
    %v244 = vpop.trf.xlu0
    %v245 = vpop.trf.xlu0
    %v246 = vpop.trf.xlu0
    %v247 = vpop.trf.xlu0
    %v248 = vpop.trf.xlu0
    %249 = vset.pattern.permute.xlu0 0
    %250 = vperm.xlu0 %249, %v216
    %v251 = vpop.permute.xlu0 %250
    %v252 = vlaneseq
    %v253 = vshrl.u32 %v252, 7
    %v254 = vsub.s32 0, %v253
    %v255 = vrot.slane %v233, %v254
    %vm256 = vcmp.eq.s32.totalorder %v251, %v255
    %v257 = vsub.f32 %v213, 0.6
    %v258 = vmul.f32 %v257, -10.0
    %v259 = vsub.f32 %v213, 0.4
    %v260 = vmul.f32 %v259, 40.0
    %v261 = vsel %vm256, %v258, %v260
    %v262 = vmax.f32 %v261, 0.0
    %v263 = vand.u32 2147483647, %v261
    %v264 = vsub.f32 0.0, %v263
    %v265 = vmul.f32 %v264, 1.442695
    %v266 = vpow.pop %v265
    %v267 = vadd.f32 %v266, 1.0
    %v268 = vlog2.pop %v267
    %v269 = vmul.f32 %v268, 0.6931472
    %v270 = vmul.f32 -0.5, %v266
    %v271 = vadd.f32 %v270, 1.0
    %v272 = vmul.f32 %v271, %v266
    %v273 = vand.u32 2147483647, %v266
    %vm274 = vcmp.lt.f32.partialorder %v273, 0.0004427343
    %v275 = vsel %vm274, %v272, %v269
    %v276 = vadd.f32 %v262, %v275
    %vm277 = vcmask 64512
    %v278 = vsel %vm277, %v276, 0.0
    %279 = vadd.xlane.f32.xlu0 %v278
    %v280 = vpop.xlane.xlu0 %279
    %v281 = vrot.slane %v280, 4
    %v282 = vadd.f32 %v280, %v281
    %v283 = vrot.slane %v282, 2
    %v284 = vadd.f32 %v282, %v283
    %v285 = vrot.slane %v284, 1
    %v286 = vadd.f32 %v284, %v285
    %s287 = vtos %v286
    %s288 = smul.f32 %s287, 2.0
    %v289 = vrcp.pop 8.0
    %s290 = vtos %v289
    %s291 = smul.f32 %s288, %s290
    %v292 = vlaneseq
    %v293 = vand.u32 %v292, 127
    %vm294 = vcmp.eq.s32.totalorder %v293, 4
    %vm295 = vcmp.eq.s32.totalorder %v293, 5
    %v296 = vstv %s291
    %v297 = vsel %vm295, %v296, 0.0
    %v298 = vstv %s122
    %v299 = vsel %vm294, %v298, %v297
    %300 = vst [vmem:[%s5] sm:$0xff] %v299
    %301 = vst [vmem:[%s5 + $0x8] sm:$0xff] %v299
  $region29: #{loss_computation.1} parent=0 // pred_fallthru
    _
  %s302 = sadd.s32 0, 0
  %v303 = vld [vmem:[%s0] sm:$0xff]
  %v304 = vld [vmem:[%s0 + $0x8] sm:$0xff]
  %v305 = vld [vmem:[%s35] sm:$0xf]
  %v306 = vld [vmem:[%s35 + $0x4] sm:$0xf]
  %v307 = vld [vmem:[%s35 + $0x8] sm:$0xf]
  %v308 = vld [vmem:[%s35 + $0xc] sm:$0xf]
  %v309 = vunpack.c.l.bf16 %v305
  %v310 = vunpack.c.l.bf16 %v306
  %v311 = vunpack.c.l.bf16 %v307
  %v312 = vunpack.c.l.bf16 %v308
  %vm313 = vcmask 261120
  %v315 = vsel %vm313, %v303, 0
  %v318 = vsel %vm313, %v304, 0
  %320 = vmatprep.subr.mxu0 0.0
  %321 = vmatpush1.msra.mxu0 %v309
  %322 = vmatprep.subr.mxu0 0.0
  %323 = vmatpush1.msra.mxu0 %v310
  %324 = vmatprep.subr.mxu0 0.0
  %325 = vmatpush1.msra.mxu0 %v311
  %326 = vmatprep.subr.mxu0 0.0
  %327 = vmatpush1.msra.mxu0 %v312
  %328 = vmatprep.subr.mxu0 0.0
  %329 = vmatpush1.msra.mxu0 0.0
  %330 = vmatprep.subr.mxu0 0.0
  %331 = vmatpush1.msra.mxu0 0.0
  %332 = vmatprep.subr.mxu0 0.0
  %333 = vmatpush1.msra.mxu0 0.0
  %334 = vmatprep.subr.mxu0 0.0
  %335 = vmatpush1.msra.mxu0 0.0
  %336 = vmatprep.subr.mxu0 0.0
  %337 = vmatpush1.msra.mxu0 0.0
  %338 = vmatprep.subr.mxu0 0.0
  %339 = vmatpush1.msra.mxu0 0.0
  %340 = vmatprep.subr.mxu0 0.0
  %341 = vmatpush1.msra.mxu0 0.0
  %342 = vmatprep.subr.mxu0 0.0
  %343 = vmatpush1.msra.mxu0 0.0
  %344 = vmatprep.subr.mxu0 0.0
  %345 = vmatpush1.msra.mxu0 0.0
  %346 = vmatprep.subr.mxu0 0.0
  %347 = vmatpush1.msra.mxu0 0.0
  %348 = vmatprep.subr.mxu0 0.0
  %349 = vmatpush1.msra.mxu0 0.0
  %350 = vmatprep.subr.mxu0 0.0
  %351 = vmatpush1.msra.mxu0 0.0
  %352 = vmatprep.subr.mxu0 0.0
  %353 = vmatpush1.msra.mxu0 0.0
  %354 = vmatprep.subr.mxu0 0.0
  %355 = vmatpush1.msra.mxu0 0.0
  %356 = vmatprep.subr.mxu0 0.0
  %357 = vmatpush1.msra.mxu0 0.0
  %358 = vmatprep.subr.mxu0 0.0
  %359 = vmatpush1.msra.mxu0 0.0
  %360 = vmatprep.subr.mxu0 0.0
  %361 = vmatpush1.msra.mxu0 0.0
  %362 = vmatprep.subr.mxu0 0.0
  %363 = vmatpush1.msra.mxu0 0.0
  %364 = vmatprep.subr.mxu0 0.0
  %365 = vmatpush1.msra.mxu0 0.0
  %366 = vmatprep.subr.mxu0 0.0
  %367 = vmatpush1.msra.mxu0 0.0
  %368 = vmatprep.subr.mxu0 0.0
  %369 = vmatpush1.msra.mxu0 0.0
  %370 = vmatprep.subr.mxu0 0.0
  %371 = vmatpush1.msra.mxu0 0.0
  %372 = vmatprep.subr.mxu0 0.0
  %373 = vmatpush1.msra.mxu0 0.0
  %374 = vmatprep.subr.mxu0 0.0
  %375 = vmatpush1.msra.mxu0 0.0
  %376 = vmatprep.subr.mxu0 0.0
  %377 = vmatpush1.msra.mxu0 0.0
  %378 = vmatprep.subr.mxu0 0.0
  %379 = vmatpush1.msra.mxu0 0.0
  %380 = vmatprep.subr.mxu0 0.0
  %381 = vmatpush1.msra.mxu0 0.0
  %382 = vmatprep.subr.mxu0 0.0
  %383 = vmatpush1.msra.mxu0 0.0
  %384 = vmatprep.mubr.f32.mxu0 0.0
  %385 = vmatmul.mubr.f32.gmra.mrb[0].mxu0 %v315
  %v386 = vpop.f32.mrb[0].mxu0
  %v387 = vadd.f32 0.0, %v386
  %v388 = vpop.f32.mrb[0].mxu0
  %389 = vmatprep.mubr.f32.mxu0 0.0
  %390 = vmatmul.mubr.f32.gmra.mrb[0].mxu0 %v318
  %v391 = vpop.f32.mrb[0].mxu0
  %v392 = vadd.f32 0.0, %v391
  %v393 = vpop.f32.mrb[0].mxu0
  %394 = vdwg.mxu0
  %v395 = vlaneseq
  %v396 = vand.u32 %v395, 127
  %v397 = vld [vmem:[#allocation4] sm:$0xff]
  %v398 = vld [vmem:[#allocation4 + $0x8] sm:$0xff]
  %399 = vadd.xlane.f32.xlu0 %v387
  %v400 = vpop.xlane.xlu0 %399
  %401 = vadd.xlane.f32.xlu0 %v392
  %v402 = vpop.xlane.xlu0 %401
  %v403 = vadd.f32 %v397, %v400
  %v404 = vadd.f32 %v398, %v402
  %vm405 = vcmask 7168
  %406 = vst.msk [vmem:[#allocation4] sm:$0xff] %vm405, %v403
  %407 = vst.msk [vmem:[#allocation4 + $0x8] sm:$0xff] %vm405, %v404
  %v408 = vld [vmem:[%s2] sm:$0xff]
  %v409 = vld [vmem:[%s2 + $0x8] sm:$0xff]
  %s410 = smul.u32 %s302, 128
  %v411 = vstv %s410
  %v412 = vsub.s32 %v408, %v411
  %v413 = vsub.s32 %v409, %v411
  %v414 = vld [vmem:[#allocation5] sm:$0xff]
  %v415 = vld [vmem:[#allocation5 + $0x8] sm:$0xff]
  %416 = vset.pattern.permute.xlu0 0
  %417 = vperm.xlu0 %416, %v412
  %v418 = vpop.permute.xlu0 %417
  %419 = vset.pattern.permute.xlu0 0
  %420 = vperm.xlu0 %419, %v413
  %v421 = vpop.permute.xlu0 %420
  %vm422 = vcmp.eq.s32.totalorder %v396, %v418
  %vm423 = vcmp.eq.s32.totalorder %v396, %v421
  %v424 = vsel %vm422, %v387, 0.0
  %v425 = vsel %vm423, %v392, 0.0
  %426 = vadd.xlane.f32.xlu0 %v424
  %v427 = vpop.xlane.xlu0 %426
  %428 = vadd.xlane.f32.xlu0 %v425
  %v429 = vpop.xlane.xlu0 %428
  %v430 = vadd.f32 %v414, %v427
  %v431 = vadd.f32 %v415, %v429
  %432 = vst.msk [vmem:[#allocation5] sm:$0xff] %vm405, %v430
  %433 = vst.msk [vmem:[#allocation5 + $0x8] sm:$0xff] %vm405, %v431
  %s434 = sadd.s32 %s410, 128
  %p435 = scmp.gt.s32.totalorder %s434, 16
  %p436 = scmp.le.s32.totalorder %s434, 16
  // Predicated region
  $region30: #{loss_computation.1} parent=0 // pred_check
    %p437 = pneg %p436
  $region31: #{loss_computation.1} parent=0 // pred_check_branch
    %439 = sbr.rel (%p437) target = $region33
  $region32: #{loss_computation.1} parent=0 // pred_region
    %v440 = vld [vmem:[#allocation2] sm:$0xff]
    %v441 = vld [vmem:[#allocation2 + $0x8] sm:$0xff]
    %442 = vmax.xlane.f32.xlu0 %v387
    %v443 = vpop.xlane.xlu0 %442
    %444 = vmax.xlane.f32.xlu0 %v392
    %v445 = vpop.xlane.xlu0 %444
    %v446 = vmax.f32 %v440, %v443
    %v447 = vmax.f32 %v441, %v445
    %v448 = vld [vmem:[#allocation3] sm:$0xff]
    %v449 = vld [vmem:[#allocation3 + $0x8] sm:$0xff]
    %v450 = vsub.f32 %v440, %v446
    %v451 = vsub.f32 %v441, %v447
    %v452 = vmul.f32 %v450, 1.442695
    %v453 = vpow.pop %v452
    %v454 = vmul.f32 %v451, 1.442695
    %v455 = vpow.pop %v454
    %v456 = vmul.f32 %v448, %v453
    %v457 = vmul.f32 %v449, %v455
    %459 = vset.pattern.permute.xlu0 0
    %460 = vperm.xlu0 %459, %v446
    %v461 = vpop.permute.xlu0 %460
    %464 = vset.pattern.permute.xlu0 0
    %465 = vperm.xlu0 %464, %v447
    %v466 = vpop.permute.xlu0 %465
    %v468 = vsub.f32 %v387, %v461
    %v469 = vsub.f32 %v392, %v466
    %v470 = vmul.f32 %v468, 1.442695
    %v471 = vpow.pop %v470
    %v472 = vmul.f32 %v469, 1.442695
    %v473 = vpow.pop %v472
    %474 = vadd.xlane.f32.xlu0 %v471
    %v475 = vpop.xlane.xlu0 %474
    %476 = vadd.xlane.f32.xlu0 %v473
    %v477 = vpop.xlane.xlu0 %476
    %v478 = vadd.f32 %v456, %v475
    %v479 = vadd.f32 %v457, %v477
    %480 = vst.msk [vmem:[#allocation3] sm:$0xff] %vm405, %v478
    %481 = vst.msk [vmem:[#allocation3 + $0x8] sm:$0xff] %vm405, %v479
    %482 = vst.msk [vmem:[#allocation2] sm:$0xff] %vm405, %v446
    %483 = vst.msk [vmem:[#allocation2 + $0x8] sm:$0xff] %vm405, %v447
  $region33: #{loss_computation.1} parent=0 // pred_fallthru
    _
  // Predicated region
  $region34: #{loss_computation.1} parent=0 // pred_check
    %p484 = pneg %p435
  $region35: #{loss_computation.1} parent=0 // pred_check_branch
    %486 = sbr.rel (%p484) target = $region37
  $region36: #{loss_computation.1} parent=0 // pred_region
    %s487 = ssub.s32 16, %s410
    %v488 = vstv %s487
    %vm489 = vcmp.lt.s32.totalorder %v396, %v488
    %v490 = vsel %vm489, %v387, -1e+30
    %v491 = vsel %vm489, %v392, -1e+30
    %v492 = vld [vmem:[#allocation2] sm:$0xff]
    %v493 = vld [vmem:[#allocation2 + $0x8] sm:$0xff]
    %494 = vmax.xlane.f32.xlu0 %v490
    %v495 = vpop.xlane.xlu0 %494
    %496 = vmax.xlane.f32.xlu0 %v491
    %v497 = vpop.xlane.xlu0 %496
    %v498 = vmax.f32 %v492, %v495
    %v499 = vmax.f32 %v493, %v497
    %v500 = vld [vmem:[#allocation3] sm:$0xff]
    %v501 = vld [vmem:[#allocation3 + $0x8] sm:$0xff]
    %v502 = vsub.f32 %v492, %v498
    %v503 = vsub.f32 %v493, %v499
    %v504 = vmul.f32 %v502, 1.442695
    %v505 = vpow.pop %v504
    %v506 = vmul.f32 %v503, 1.442695
    %v507 = vpow.pop %v506
    %v508 = vmul.f32 %v500, %v505
    %v509 = vmul.f32 %v501, %v507
    %511 = vset.pattern.permute.xlu0 0
    %512 = vperm.xlu0 %511, %v498
    %v513 = vpop.permute.xlu0 %512
    %516 = vset.pattern.permute.xlu0 0
    %517 = vperm.xlu0 %516, %v499
    %v518 = vpop.permute.xlu0 %517
    %v520 = vsub.f32 %v490, %v513
    %v521 = vsub.f32 %v491, %v518
    %v522 = vmul.f32 %v520, 1.442695
    %v523 = vpow.pop %v522
    %v524 = vmul.f32 %v521, 1.442695
    %v525 = vpow.pop %v524
    %526 = vadd.xlane.f32.xlu0 %v523
    %v527 = vpop.xlane.xlu0 %526
    %528 = vadd.xlane.f32.xlu0 %v525
    %v529 = vpop.xlane.xlu0 %528
    %v530 = vadd.f32 %v508, %v527
    %v531 = vadd.f32 %v509, %v529
    %532 = vst.msk [vmem:[#allocation3] sm:$0xff] %vm405, %v530
    %533 = vst.msk [vmem:[#allocation3 + $0x8] sm:$0xff] %vm405, %v531
    %534 = vst.msk [vmem:[#allocation2] sm:$0xff] %vm405, %v498
    %535 = vst.msk [vmem:[#allocation2 + $0x8] sm:$0xff] %vm405, %v499
  $region37: #{loss_computation.1} parent=0 // pred_fallthru
    _
  // Predicated region
  $region38: #{loss_computation.1} parent=0 // pred_check
    %p536 = pneg %p37
  $region39: #{loss_computation.1} parent=0 // pred_check_branch
    %538 = sbr.rel (%p536) target = $region41
  $region40: #{loss_computation.1} parent=0 // pred_region
    %vm539 = vcmp.eq.s32.totalorder %v396, 0
    %v540 = vld [vmem:[#allocation2] sm:$0xff]
    %v541 = vld [vmem:[#allocation2 + $0x8] sm:$0xff]
    %vm542 = vcmp.eq.s32.totalorder %v396, 1
    %v543 = vld [vmem:[#allocation3] sm:$0xff]
    %v544 = vld [vmem:[#allocation3 + $0x8] sm:$0xff]
    %vm545 = vcmp.eq.s32.totalorder %v396, 2
    %v546 = vld [vmem:[#allocation4] sm:$0xff]
    %v547 = vld [vmem:[#allocation4 + $0x8] sm:$0xff]
    %vm548 = vcmp.eq.s32.totalorder %v396, 3
    %v549 = vld [vmem:[#allocation5] sm:$0xff]
    %v550 = vld [vmem:[#allocation5 + $0x8] sm:$0xff]
    %v551 = vld [vmem:[%s5] sm:$0xff]
    %v552 = vld [vmem:[%s5 + $0x8] sm:$0xff]
    %554 = vset.pattern.permute.xlu0 0
    %555 = vperm.xlu0 %554, %v549
    %v556 = vpop.permute.xlu0 %555
    %559 = vset.pattern.permute.xlu0 0
    %560 = vperm.xlu0 %559, %v550
    %v561 = vpop.permute.xlu0 %560
    %v563 = vsel %vm548, %v556, %v551
    %v564 = vsel %vm548, %v561, %v552
    %566 = vset.pattern.permute.xlu0 0
    %567 = vperm.xlu0 %566, %v546
    %v568 = vpop.permute.xlu0 %567
    %571 = vset.pattern.permute.xlu0 0
    %572 = vperm.xlu0 %571, %v547
    %v573 = vpop.permute.xlu0 %572
    %v575 = vsel %vm545, %v568, %v563
    %v576 = vsel %vm545, %v573, %v564
    %578 = vset.pattern.permute.xlu0 0
    %579 = vperm.xlu0 %578, %v543
    %v580 = vpop.permute.xlu0 %579
    %583 = vset.pattern.permute.xlu0 0
    %584 = vperm.xlu0 %583, %v544
    %v585 = vpop.permute.xlu0 %584
    %v587 = vsel %vm542, %v580, %v575
    %v588 = vsel %vm542, %v585, %v576
    %590 = vset.pattern.permute.xlu0 0
    %591 = vperm.xlu0 %590, %v540
    %v592 = vpop.permute.xlu0 %591
    %595 = vset.pattern.permute.xlu0 0
    %596 = vperm.xlu0 %595, %v541
    %v597 = vpop.permute.xlu0 %596
    %v599 = vsel %vm539, %v592, %v587
    %v600 = vsel %vm539, %v597, %v588
    %601 = vst [vmem:[%s5] sm:$0xff] %v599
    %602 = vst [vmem:[%s5 + $0x8] sm:$0xff] %v600
  $region41: #{loss_computation.1} parent=0 // pred_fallthru
    _
  // Predicated region
  $region42: #{loss_computation.1} parent=0 // pred_check
    _
  $region43: #{loss_computation.1} parent=0 // pred_check_branch
    %604 = sbr.rel (0) target = $region45
  $region44: #{loss_computation.1} parent=0 // pred_region
    _
  $region45: #{loss_computation.1} parent=0 // pred_fallthru
    _
  // Predicated region
  $region46: #{loss_computation.1} parent=0 // pred_check
    _
  $region47: #{loss_computation.1} parent=0 // pred_check_branch
    %606 = sbr.rel (0) target = $region49
  $region48: #{loss_computation.1} parent=0 // pred_region
    _
  $region49: #{loss_computation.1} parent=0 // pred_fallthru
    _

</llo_original>
